<compile_context>
chip_gen: v7x
topology: tpu7x:2x2x1
jax: 0.10.0
libtpu: 0.0.40
codegen_flags: <defaults>
</compile_context>

<pallas_src>
import jax
import jax.numpy as jnp
from jax.experimental import pallas as pl
from jax.experimental.pallas import tpu as pltpu


# ----------------------------------------------------------------------------
# Generation-aware scoped-VMEM request.
# ----------------------------------------------------------------------------
def _vmem_limit_bytes():
    """Half of physical VMEM, capped at 64 MiB.
    v5e/v6e (128 MiB) -> 64 MiB; v7x (64 MiB per TC) -> 32 MiB."""
    try:
        cap = int(getattr(pltpu.get_tpu_info(), "vmem_capacity_bytes", 64 << 20))
    except Exception:
        cap = 64 << 20                       # conservative; legal on every generation
    return max(16 << 20, min(cap // 2, 64 << 20))


# ----------------------------------------------------------------------------
# Kernel 1: per-channel sum / sum-of-squares, per-batch-block partials.
# ----------------------------------------------------------------------------
def _stats_kernel(xr_ref, xi_ref, acc_ref):
    # acc_ref: (1, C, 4) f32 partial accumulator for THIS batch block, resident
    # in VMEM across the L grid axis.
    #   cols: [sum(x_r), sum(x_r^2), sum(x_i), sum(x_i^2)]
    @pl.when(pl.program_id(1) == 0)
    def _():
        acc_ref[...] = jnp.zeros_like(acc_ref)

    xr = xr_ref[...].astype(jnp.float32)     # (TB, C, TL)
    xi = xi_ref[...].astype(jnp.float32)

    def colsum(a):                           # (TB, C, TL) -> (C, 1)
        # axis 0: plain vreg adds (major dim); then a lane reduction with
        # channels staying on sublanes -> no transposes.
        return jnp.sum(jnp.sum(a, axis=0), axis=1, keepdims=True)

    # Pack the four column sums and accumulate with a single store.
    sums = jnp.concatenate(
        [colsum(xr), colsum(xr * xr), colsum(xi), colsum(xi * xi)], axis=1)  # (C, 4)
    acc_ref[...] += sums[None, :, :]


# ----------------------------------------------------------------------------
# Kernel 2: fused normalize + affine, pure elementwise, tiled & pipelined.
# ----------------------------------------------------------------------------
def _apply_kernel(params_ref, xr_ref, xi_ref, outr_ref, outi_ref):
    # params_ref: (C, 4) f32 = [scale_r, shift_r, scale_i, shift_i] per channel.
    p = params_ref[...]
    scale_r = p[None, :, 0:1]                # (1, C, 1) broadcast over batch & lanes
    shift_r = p[None, :, 1:2]
    scale_i = p[None, :, 2:3]
    shift_i = p[None, :, 3:4]

    xr = xr_ref[...].astype(jnp.float32)
    xi = xi_ref[...].astype(jnp.float32)
    outr_ref[...] = (xr * scale_r + shift_r).astype(outr_ref.dtype)
    outi_ref[...] = (xi * scale_i + shift_i).astype(outi_ref.dtype)


# ----------------------------------------------------------------------------
# Tiling helper: exact divisors only (keeps the stats reduction free of padded
# garbage); last-dim tiles are full-extent or multiples of 128.  Budget is in
# ELEMENTS, already including double-buffering + f32-temp byte factors.
# ----------------------------------------------------------------------------
def _pick_tiles(B, C, L, elem_budget):
    if L % 128 != 0 or C * L <= elem_budget:
        tl = L                               # full extent (always legal)
    else:
        tl = 128
        d = 256
        while d <= L:
            if L % d == 0 and C * d <= elem_budget:
                tl = d
            d += 128
    tb = 1
    for t in range(1, B + 1):
        if B % t == 0 and t * C * tl <= elem_budget:
            tb = t
    return tb, tl


# ----------------------------------------------------------------------------
# Wrapper: NaiveComplexBatchNorm1d.forward
# ----------------------------------------------------------------------------
def naive_complex_batch_norm1d(
    input_r, input_i,
    weight_r=None, bias_r=None, weight_i=None, bias_i=None,
    running_mean_r=None, running_var_r=None,
    running_mean_i=None, running_var_i=None,
    *, eps=1e-5, training=True, tile_budget_bytes=None):
    """Returns (bn_r(input_r), bn_i(input_i)) — matching the PyTorch module.

    tile_budget_bytes: optional per-tensor tile-byte cap (testing / forcing a
    multi-step grid).  By default tiles are sized from the scoped-VMEM limit.
    """
    assert input_r.shape == input_i.shape, "real/imag parts must have the same shape"

    orig_ndim = input_r.ndim
    transposed_2d = False
    if orig_ndim == 2:
        # (N, C): put N on the lane axis via a (1, C, N) view instead of the
        # lane-starved (N, C, 1) reshape.
        input_r = input_r.T[None, :, :]
        input_i = input_i.T[None, :, :]
        transposed_2d = True
    assert input_r.ndim == 3, "expected (N, C) or (N, C, L) input"
    B, C, L = input_r.shape

    f32 = jnp.float32
    w_r = jnp.ones((C,), f32) if weight_r is None else jnp.asarray(weight_r, f32)
    b_r = jnp.zeros((C,), f32) if bias_r is None else jnp.asarray(bias_r, f32)
    w_i = jnp.ones((C,), f32) if weight_i is None else jnp.asarray(weight_i, f32)
    b_i = jnp.zeros((C,), f32) if bias_i is None else jnp.asarray(bias_i, f32)

    itemsize = jnp.dtype(input_r.dtype).itemsize
    vmem_limit = _vmem_limit_bytes()
    vmem_budget = int(vmem_limit * 0.75)     # leave compiler headroom

    def _elem_budget(per_elem_bytes):
        eb = max(vmem_budget // per_elem_bytes, C * 128)
        if tile_budget_bytes is not None:
            eb = min(eb, max(tile_budget_bytes // itemsize, C * 128))
        return eb

    # Apply streams 4 tensors (2 in + 2 out, double-buffered) + ~2 f32 temps.
    tb_a, tl_a = _pick_tiles(B, C, L, _elem_budget(8 * itemsize + 8))
    # Stats streams only 2 tensors (double-buffered) + ~4 f32 temps, so it gets
    # a larger block under the same VMEM limit.
    tb_s, tl_s = _pick_tiles(B, C, L, _elem_budget(4 * itemsize + 16))

    use_batch_stats = training or (running_mean_r is None or running_var_r is None or
                                   running_mean_i is None or running_var_i is None)
    if use_batch_stats:
        nb = B // tb_s
        stats_spec = pl.BlockSpec((tb_s, C, tl_s), lambda b, l: (b, 0, l))
        partials = pl.pallas_call(
            _stats_kernel,
            out_shape=jax.ShapeDtypeStruct((nb, C, 4), jnp.float32),
            grid=(nb, L // tl_s),
            in_specs=[stats_spec, stats_spec],
            # Per-batch-block partial accumulator: block index follows b
            # ("parallel" -> megacore-shards on v7x) and is constant over l
            # ("arbitrary" accumulator axis).
            out_specs=pl.BlockSpec((1, C, 4), lambda b, l: (b, 0, 0)),
            compiler_params=pltpu.CompilerParams(
                dimension_semantics=("parallel", "arbitrary"),
                vmem_limit_bytes=vmem_limit),
        )(input_r, input_i)
        stats = jnp.sum(partials, axis=0)                       # (C, 4)
        n = float(B * L)
        mean_r = stats[:, 0] / n
        var_r = jnp.maximum(stats[:, 1] / n - mean_r * mean_r, 0.0)   # biased, like PyTorch
        mean_i = stats[:, 2] / n
        var_i = jnp.maximum(stats[:, 3] / n - mean_i * mean_i, 0.0)
    else:
        mean_r, var_r = jnp.asarray(running_mean_r, f32), jnp.asarray(running_var_r, f32)
        mean_i, var_i = jnp.asarray(running_mean_i, f32), jnp.asarray(running_var_i, f32)

    # Fold (mean, var, gamma, beta) into per-channel scale/shift: out = x*scale + shift.
    inv_r = jax.lax.rsqrt(var_r + eps)
    inv_i = jax.lax.rsqrt(var_i + eps)
    scale_r = w_r * inv_r
    shift_r = b_r - mean_r * scale_r
    scale_i = w_i * inv_i
    shift_i = b_i - mean_i * scale_i
    params = jnp.stack([scale_r, shift_r, scale_i, shift_i], axis=1)   # (C, 4) f32

    x_spec = pl.BlockSpec((tb_a, C, tl_a), lambda b, l: (b, 0, l))
    out_r, out_i = pl.pallas_call(
        _apply_kernel,
        out_shape=(jax.ShapeDtypeStruct((B, C, L), input_r.dtype),
                   jax.ShapeDtypeStruct((B, C, L), input_i.dtype)),
        grid=(B // tb_a, L // tl_a),
        in_specs=[pl.BlockSpec((C, 4), lambda b, l: (0, 0)),   # grid-constant params
                  x_spec, x_spec],
        out_specs=(x_spec, x_spec),
        compiler_params=pltpu.CompilerParams(
            dimension_semantics=("parallel", "parallel"),       # megacore-shardable
            vmem_limit_bytes=vmem_limit),
    )(params, input_r, input_i)

    if transposed_2d:
        out_r = out_r[0].T
        out_i = out_i[0].T
    return out_r, out_i


# ----------------------------------------------------------------------------
# Pure-JAX reference of the PyTorch forward (training mode) + demo.
# ----------------------------------------------------------------------------
def _reference(input_r, input_i, w_r, b_r, w_i, b_i, eps=1e-5):
    def bn(x, w, b):
        mean = jnp.mean(x, axis=(0, 2), keepdims=True)
        var = jnp.var(x, axis=(0, 2), keepdims=True)           # biased variance
        return (x - mean) / jnp.sqrt(var + eps) * w[None, :, None] + b[None, :, None]
    return bn(input_r, w_r, b_r), bn(input_i, w_i, b_i)


if __name__ == "__main__":
    key = jax.random.PRNGKey(0)
    kr, ki, kwr, kbr, kwi, kbi, k2r, k2i = jax.random.split(key, 8)

    B, C, L = 8, 8, 512     # (batch, num_features, seq) — lane-dense last dim
    x_r = 1.7 * jax.random.normal(kr, (B, C, L), jnp.float32) + 0.3
    x_i = 0.6 * jax.random.normal(ki, (B, C, L), jnp.float32) - 1.1
    w_r = 1.0 + 0.1 * jax.random.normal(kwr, (C,), jnp.float32)
    b_r = 0.1 * jax.random.normal(kbr, (C,), jnp.float32)
    w_i = 1.0 + 0.1 * jax.random.normal(kwi, (C,), jnp.float32)
    b_i = 0.1 * jax.random.normal(kbi, (C,), jnp.float32)
    ref_r, ref_i = _reference(x_r, x_i, w_r, b_r, w_i, b_i)

    # 1) Training mode, tiny tile budget -> multi-step grid on both axes
    #    (exercises the per-batch-block partials and the L-axis accumulator).
    out_r, out_i = naive_complex_batch_norm1d(
        x_r, x_i, w_r, b_r, w_i, b_i, training=True, tile_budget_bytes=8 * 1024)
    jax.block_until_ready(out_r); jax.block_until_ready(out_i)
    assert jnp.allclose(out_r, ref_r, atol=1e-4, rtol=1e-4), \
        float(jnp.max(jnp.abs(out_r - ref_r)))
    assert jnp.allclose(out_i, ref_i, atol=1e-4, rtol=1e-4), \
        float(jnp.max(jnp.abs(out_i - ref_i)))

    # 2) Training mode, default (VMEM-derived) tile budget -> big blocks.
    out_r2, out_i2 = naive_complex_batch_norm1d(
        x_r, x_i, w_r, b_r, w_i, b_i, training=True)
    jax.block_until_ready(out_r2)
    assert jnp.allclose(out_r2, ref_r, atol=1e-4, rtol=1e-4)
    assert jnp.allclose(out_i2, ref_i, atol=1e-4, rtol=1e-4)

    # 3) Eval mode with provided running statistics (apply kernel only).
    rm = jnp.zeros((C,), jnp.float32)
    rv = jnp.ones((C,), jnp.float32)
    e_r, e_i = naive_complex_batch_norm1d(
        x_r, x_i, w_r, b_r, w_i, b_i,
        running_mean_r=rm, running_var_r=rv,
        running_mean_i=rm, running_var_i=rv, training=False)
    jax.block_until_ready(e_r)
    ref_er = x_r / jnp.sqrt(1.0 + 1e-5) * w_r[None, :, None] + b_r[None, :, None]
    ref_ei = x_i / jnp.sqrt(1.0 + 1e-5) * w_i[None, :, None] + b_i[None, :, None]
    assert jnp.allclose(e_r, ref_er, atol=1e-4, rtol=1e-4)
    assert jnp.allclose(e_i, ref_ei, atol=1e-4, rtol=1e-4)

    # 4) 2-D (N, C) input path (N on lanes via transpose, stats over N).
    N = 96
    x2_r = 0.9 * jax.random.normal(k2r, (N, C), jnp.float32) + 0.5
    x2_i = 1.3 * jax.random.normal(k2i, (N, C), jnp.float32) - 0.2
    o2_r, o2_i = naive_complex_batch_norm1d(
        x2_r, x2_i, w_r, b_r, w_i, b_i, training=True)
    jax.block_until_ready(o2_r)
    ref2_r, ref2_i = _reference(x2_r.T[None], x2_i.T[None], w_r, b_r, w_i, b_i)
    assert jnp.allclose(o2_r, ref2_r[0].T, atol=1e-4, rtol=1e-4)
    assert jnp.allclose(o2_i, ref2_i[0].T, atol=1e-4, rtol=1e-4)

    print("KERNEL_OK")
</pallas_src>

<mosaic_0001>
module attributes {stable_mosaic.version = 11 : i64} {
  func.func @_stats_kernel(%arg0: i32, %arg1: i32, %arg2: memref<1x8x256xf32, #tpu.memory_space<vmem>>, %arg3: memref<1x8x256xf32, #tpu.memory_space<vmem>>, %arg4: memref<1x8x4xf32, #tpu.memory_space<vmem>>) attributes {dimension_semantics = [#tpu.dimension_semantics<parallel>, #tpu.dimension_semantics<arbitrary>], iteration_bounds = array<i64: 8, 2>, scalar_prefetch = 0 : i64, scratch_operands = 0 : i64, tpu.core_type = #tpu.core_type<tc>, window_params = [{transform_indices = @transform_0, window_bounds = array<i64: 1, 8, 256>}, {transform_indices = @transform_1, window_bounds = array<i64: 1, 8, 256>}, {transform_indices = @transform_2, window_bounds = array<i64: 1, 8, 4>}]} {
    %c0_i32 = arith.constant 0 : i32
    %0 = arith.cmpi eq, %arg1, %c0_i32 : i32
    %1 = arith.extui %0 : i1 to i32
    %c0_i32_0 = arith.constant 0 : i32
    %2 = arith.cmpi ne, %1, %c0_i32_0 : i32
    scf.if %2 {
      %cst_19 = arith.constant 0.000000e+00 : f32
      %24 = vector.broadcast %cst_19 : f32 to vector<1x8x4xf32>
      %c0_20 = arith.constant 0 : index
      %c0_21 = arith.constant 0 : index
      %c0_22 = arith.constant 0 : index
      %25 = vector.load %arg4[%c0_20, %c0_21, %c0_22] : memref<1x8x4xf32, #tpu.memory_space<vmem>>, vector<1x8x4xf32>
      tpu.vector_store %arg4[%c0_20, %c0_21, %c0_22], %24 {strides = array<i32>} : memref<1x8x4xf32, #tpu.memory_space<vmem>>, vector<1x8x4xf32>,
    } else {
    }
    %c0 = arith.constant 0 : index
    %c0_1 = arith.constant 0 : index
    %c0_2 = arith.constant 0 : index
    %3 = vector.load %arg2[%c0, %c0_1, %c0_2] : memref<1x8x256xf32, #tpu.memory_space<vmem>>, vector<1x8x256xf32>
    %c0_3 = arith.constant 0 : index
    %c0_4 = arith.constant 0 : index
    %c0_5 = arith.constant 0 : index
    %4 = vector.load %arg3[%c0_3, %c0_4, %c0_5] : memref<1x8x256xf32, #tpu.memory_space<vmem>>, vector<1x8x256xf32>
    %cst = arith.constant dense<0.000000e+00> : vector<8x256xf32>
    %5 = vector.multi_reduction <add>, %3, %cst [0] : vector<1x8x256xf32> to vector<8x256xf32>
    %cst_6 = arith.constant dense<0.000000e+00> : vector<8xf32>
    %6 = vector.multi_reduction <add>, %5, %cst_6 [1] : vector<8x256xf32> to vector<8xf32>
    %7 = vector.shape_cast %6 : vector<8xf32> to vector<8x1xf32>
    %8 = arith.mulf %3, %3 : vector<1x8x256xf32>
    %cst_7 = arith.constant dense<0.000000e+00> : vector<8x256xf32>
    %9 = vector.multi_reduction <add>, %8, %cst_7 [0] : vector<1x8x256xf32> to vector<8x256xf32>
    %cst_8 = arith.constant dense<0.000000e+00> : vector<8xf32>
    %10 = vector.multi_reduction <add>, %9, %cst_8 [1] : vector<8x256xf32> to vector<8xf32>
    %11 = vector.shape_cast %10 : vector<8xf32> to vector<8x1xf32>
    %cst_9 = arith.constant dense<0.000000e+00> : vector<8x256xf32>
    %12 = vector.multi_reduction <add>, %4, %cst_9 [0] : vector<1x8x256xf32> to vector<8x256xf32>
    %cst_10 = arith.constant dense<0.000000e+00> : vector<8xf32>
    %13 = vector.multi_reduction <add>, %12, %cst_10 [1] : vector<8x256xf32> to vector<8xf32>
    %14 = vector.shape_cast %13 : vector<8xf32> to vector<8x1xf32>
    %15 = arith.mulf %4, %4 : vector<1x8x256xf32>
    %cst_11 = arith.constant dense<0.000000e+00> : vector<8x256xf32>
    %16 = vector.multi_reduction <add>, %15, %cst_11 [0] : vector<1x8x256xf32> to vector<8x256xf32>
    %cst_12 = arith.constant dense<0.000000e+00> : vector<8xf32>
    %17 = vector.multi_reduction <add>, %16, %cst_12 [1] : vector<8x256xf32> to vector<8xf32>
    %18 = vector.shape_cast %17 : vector<8xf32> to vector<8x1xf32>
    %19 = tpu.concatenate %7, %11, %14, %18 in 1 : vector<8x1xf32>, vector<8x1xf32>, vector<8x1xf32>, vector<8x1xf32> -> vector<8x4xf32>
    %c0_13 = arith.constant 0 : index
    %c0_14 = arith.constant 0 : index
    %c0_15 = arith.constant 0 : index
    %20 = vector.load %arg4[%c0_13, %c0_14, %c0_15] : memref<1x8x4xf32, #tpu.memory_space<vmem>>, vector<1x8x4xf32>
    %21 = vector.shape_cast %19 : vector<8x4xf32> to vector<1x8x4xf32>
    %22 = arith.addf %20, %21 : vector<1x8x4xf32>
    %c0_16 = arith.constant 0 : index
    %c0_17 = arith.constant 0 : index
    %c0_18 = arith.constant 0 : index
    %23 = vector.load %arg4[%c0_16, %c0_17, %c0_18] : memref<1x8x4xf32, #tpu.memory_space<vmem>>, vector<1x8x4xf32>
    tpu.vector_store %arg4[%c0_16, %c0_17, %c0_18], %22 {strides = array<i32>} : memref<1x8x4xf32, #tpu.memory_space<vmem>>, vector<1x8x4xf32>,
    return
  }
  func.func @transform_0(%arg0: i32, %arg1: i32) -> (i32, i32, i32) {
    %c0_i32 = arith.constant 0 : i32
    %c0_i32_0 = arith.constant 0 : i32
    return %arg0, %c0_i32, %arg1 : i32, i32, i32
  }
  func.func @transform_1(%arg0: i32, %arg1: i32) -> (i32, i32, i32) {
    %c0_i32 = arith.constant 0 : i32
    %c0_i32_0 = arith.constant 0 : i32
    return %arg0, %c0_i32, %arg1 : i32, i32, i32
  }
  func.func @transform_2(%arg0: i32, %arg1: i32) -> (i32, i32, i32) {
    %c0_i32 = arith.constant 0 : i32
    %c0_i32_0 = arith.constant 0 : i32
    %c0_i32_1 = arith.constant 0 : i32
    return %arg0, %c0_i32, %c0_i32_0 : i32, i32, i32
  }
}

</mosaic_0001>

<llo_original>
// kernel: tpu_custom_call.1
$region0: #{tpu_custom_call.1}
  #allocation0 [shape = 'u32[]', space=smem, size = 0x4, offset = 0x4, fixed_abs, tag = 'smem constant byte address 0x4 - core index']
  #allocation1 [shape = 'u32[144,128]{1,0:T(1,128)}', space=vmem, size = 0x12000, scoped, tag = 'internal scratch']
  %s0 = inlined_call_operand.hbm [shape: f32[8,8,512], index: 0, kind: input, shape index: {}]
  %s1 = inlined_call_operand.hbm [shape: f32[8,8,512], index: 1, kind: input, shape index: {}]
  %s2 = inlined_call_operand.vmem [shape: f32[8,8,4], index: 2, kind: output, shape index: {}]
  %s3 = sld [smem:[#allocation0]]
  $region53: #{tpu_custom_call.1} parent=0
    _
  %s5 = ssub.s32 1, %s3
  %s6 = scalar_select 0, %s5, %s3
  $region1: #{tpu_custom_call.1} parent=0
    #allocation2 [shape = 'u8[16384]{0}', space=vmem, size = 0x4000, scoped, tag = 'input window, operand 0']
    #allocation3 [shape = 's32[2]{0}', space=sflag, size = 0x8, scoped, tag = 'scoped memory for tpu_custom_call.1']
    #allocation4 [shape = 'u8[16384]{0}', space=vmem, size = 0x4000, scoped, tag = 'input window, operand 1']
    #allocation5 [shape = 's32[2]{0}', space=sflag, size = 0x8, scoped, tag = 'scoped memory for tpu_custom_call.1']
    %7 = vsyncpa [#allocation3], 0
    %s8 = scalar_lea.sflag [#allocation3], 1
    %9 = vsyncpa %s8, 0
    %10 = vsyncpa [#allocation5], 0
    %s11 = scalar_lea.sflag [#allocation5], 1
    %12 = vsyncpa %s11, 0
    loop: start=0, step=1, limit=18
    $region2: #{tpu_custom_call.1} parent=1 // loop_pre_header
      _
    $region3: #{tpu_custom_call.1} parent=1 // loop_header
      %s14 = sphi 0, %s18
      %p15 = scmp.ge.s32.totalorder %s14, 18
      %s21 = sphi 0, %s33
      %s22 = sphi 0, %s29
      %s23 = sphi 0, %s21
      %s24 = sphi 0, %s22
      %s25 = sphi 0, %s23
      %s26 = sphi 0, %s24
      %s38 = sphi 0, %s40
      %s41 = sphi 0, %s38
      %s42 = sphi 0, %s41
      %s58 = sphi 0, %s42
      %s66 = sphi 0, %s68
      %s69 = sphi 0, %s66
      %s70 = sphi 0, %s69
      %s86 = sphi 0, %s70
      %s92 = sphi 0, %s94
      %s95 = sphi 0, %s92
      %s96 = sphi 0, %s95
      %s112 = sphi 0, %s96
    $region4: #{tpu_custom_call.1} parent=1 // loop_header_branch
      %17 = sbr.rel (%p15) target = $region8
    $region5: #{tpu_custom_call.1} parent=1 // loop_body
      %s19 = ssub.s32 %s14, 1
      %s20 = ssub.s32 %s14, 2
      %s27 = sadd.s32 1, %s22
      %p28 = scmp.ge.s32.totalorder %s27, 2
      %s29 = scalar_select %p28, 0, %s27
      %s30 = sadd.s32 1, %s21
      %s31 = scalar_select %p28, %s30, %s21
      %p32 = scmp.ge.s32.totalorder %s31, 8
      %s33 = scalar_select %p32, 0, %s31
      %s34 = ssub.s32 %s21, %s33
      %s35 = ssub.s32 %s22, %s29
      %s36 = sor.u32 %s34, %s35
      %p37 = scmp.eq.s32.totalorder %s36, 0
      %s39 = sadd.s32 %s38, 1
      %s40 = scalar_select %p37, %s38, %s39
      %p43 = pneg %p37
      %p44 = scmp.eq.s32.totalorder %s14, 15
      %p45 = por %p43, %p44
      %p46 = scmp.ne.s32.totalorder %s38, %s41
      %p47 = scmp.eq.s32.totalorder %s14, 0
      %p48 = por %p46, %p47
      %p49 = scmp.ne.s32.totalorder %s38, %s41
      %p50 = scmp.eq.s32.totalorder %s19, 15
      %p51 = por %p49, %p50
      %p52 = scmp.ne.s32.totalorder %s41, %s42
      %p53 = scmp.eq.s32.totalorder %s19, 0
      %p54 = por %p52, %p53
      %p55 = scmp.ne.s32.totalorder %s41, %s42
      %p56 = scmp.eq.s32.totalorder %s20, 15
      %p57 = por %p55, %p56
      %p59 = scmp.ne.s32.totalorder %s42, %s58
      %p60 = scmp.eq.s32.totalorder %s20, 0
      %p61 = por %p59, %p60
      %s62 = ssub.s32 %s21, %s33
      %s63 = ssub.s32 %s22, %s29
      %s64 = sor.u32 %s62, %s63
      %p65 = scmp.eq.s32.totalorder %s64, 0
      %s67 = sadd.s32 %s66, 1
      %s68 = scalar_select %p65, %s66, %s67
      %p71 = pneg %p65
      %p72 = scmp.eq.s32.totalorder %s14, 15
      %p73 = por %p71, %p72
      %p74 = scmp.ne.s32.totalorder %s66, %s69
      %p75 = scmp.eq.s32.totalorder %s14, 0
      %p76 = por %p74, %p75
      %p77 = scmp.ne.s32.totalorder %s66, %s69
      %p78 = scmp.eq.s32.totalorder %s19, 15
      %p79 = por %p77, %p78
      %p80 = scmp.ne.s32.totalorder %s69, %s70
      %p81 = scmp.eq.s32.totalorder %s19, 0
      %p82 = por %p80, %p81
      %p83 = scmp.ne.s32.totalorder %s69, %s70
      %p84 = scmp.eq.s32.totalorder %s20, 15
      %p85 = por %p83, %p84
      %p87 = scmp.ne.s32.totalorder %s70, %s86
      %p88 = scmp.eq.s32.totalorder %s20, 0
      %p89 = por %p87, %p88
      %s90 = ssub.s32 %s21, %s33
      %p91 = scmp.eq.s32.totalorder %s90, 0
      %s93 = sadd.s32 %s92, 1
      %s94 = scalar_select %p91, %s92, %s93
      %p97 = pneg %p91
      %p98 = scmp.eq.s32.totalorder %s14, 15
      %p99 = por %p97, %p98
      %p100 = scmp.ne.s32.totalorder %s92, %s95
      %p101 = scmp.eq.s32.totalorder %s14, 0
      %p102 = por %p100, %p101
      %p103 = scmp.ne.s32.totalorder %s92, %s95
      %p104 = scmp.eq.s32.totalorder %s19, 15
      %p105 = por %p103, %p104
      %p106 = scmp.ne.s32.totalorder %s95, %s96
      %p107 = scmp.eq.s32.totalorder %s19, 0
      %p108 = por %p106, %p107
      %p109 = scmp.ne.s32.totalorder %s95, %s96
      %p110 = scmp.eq.s32.totalorder %s20, 15
      %p111 = por %p109, %p110
      %p113 = scmp.ne.s32.totalorder %s96, %s112
      %p114 = scmp.eq.s32.totalorder %s20, 0
      %p115 = por %p113, %p114
      %p116 = scmp.le.s32.totalorder 1, %s14
      %p117 = scmp.lt.s32.totalorder %s14, 17
      %p118 = pnand %p116, %p117
      %p119 = pneg %p118
      // Predicated region
      $region9: #{tpu_custom_call.1} parent=5 // pred_check
        _
      $region10: #{tpu_custom_call.1} parent=5 // pred_check_branch
        %121 = sbr.rel (%p118) target = $region12
      $region11: #{tpu_custom_call.1} parent=5 // pred_region
        %s122 = ssub.s32 %s14, 1
      $region12: #{tpu_custom_call.1} parent=5 // pred_fallthru
        _
      %p123 = scmp.lt.s32.totalorder %s14, 16
      // Predicated region
      $region13: #{tpu_custom_call.1} parent=5 // pred_check
        %p124 = pneg %p123
      $region14: #{tpu_custom_call.1} parent=5 // pred_check_branch
        %126 = sbr.rel (%p124) target = $region16
      $region15: #{tpu_custom_call.1} parent=5 // pred_region
        // Predicated region
        $region17: #{tpu_custom_call.1} parent=15 // pred_check
          %p127 = pneg %p48
        $region18: #{tpu_custom_call.1} parent=15 // pred_check_branch
          %129 = sbr.rel (%p127) target = $region20
        $region19: #{tpu_custom_call.1} parent=15 // pred_region
          %s130 = sand.u32 %s38, 1
          %s131 = scalar_lea.sflag [#allocation3], %s130
          %s132 = sand.u32 %s38, 1
          %s133 = smul.addr %s132, 16
          %s134 = scalar_lea.vmem [#allocation2], %s133
          %s135 = smul.u32 2, %s22
          %s137 = ssub.s32 256, 256
          %138 = vsyncadd %s131, %s137
          %s139 = smul.addr %s21, 4
          %s140 = sadd.s32 %s135, %s139
          %s141 = smul.addr %s140, 128
          %s142 = scalar_lea.hbm %s0, %s141
          %s144 = sshll.u32 %s134, 4
          %s145 = int_to_ptr.vmem [resolvable:$true] %s144
          %147 = dma.hbm_to_vmem [thread:$0]  %s142, 256, %s145, %s131
        $region20: #{tpu_custom_call.1} parent=15 // pred_fallthru
          _
        // Predicated region
        $region21: #{tpu_custom_call.1} parent=15 // pred_check
          %p148 = pneg %p76
        $region22: #{tpu_custom_call.1} parent=15 // pred_check_branch
          %150 = sbr.rel (%p148) target = $region24
        $region23: #{tpu_custom_call.1} parent=15 // pred_region
          %s151 = sand.u32 %s66, 1
          %s152 = scalar_lea.sflag [#allocation5], %s151
          %s153 = sand.u32 %s66, 1
          %s154 = smul.addr %s153, 16
          %s155 = scalar_lea.vmem [#allocation4], %s154
          %s156 = smul.u32 2, %s22
          %s158 = ssub.s32 256, 256
          %159 = vsyncadd %s152, %s158
          %s160 = smul.addr %s21, 4
          %s161 = sadd.s32 %s156, %s160
          %s162 = smul.addr %s161, 128
          %s163 = scalar_lea.hbm %s1, %s162
          %s165 = sshll.u32 %s155, 4
          %s166 = int_to_ptr.vmem [resolvable:$true] %s165
          %168 = dma.hbm_to_vmem [thread:$0]  %s163, 256, %s166, %s152
        $region24: #{tpu_custom_call.1} parent=15 // pred_fallthru
          _
      $region16: #{tpu_custom_call.1} parent=5 // pred_fallthru
        _
      %p169 = scmp.le.s32.totalorder 1, %s14
      %p170 = scmp.lt.s32.totalorder %s14, 17
      %p171 = pnand %p169, %p170
      %p172 = pneg %p171
      // Predicated region
      $region25: #{tpu_custom_call.1} parent=5 // pred_check
        _
      $region26: #{tpu_custom_call.1} parent=5 // pred_check_branch
        %174 = sbr.rel (%p171) target = $region28
      $region27: #{tpu_custom_call.1} parent=5 // pred_region
        %s175 = ssub.s32 %s14, 1
        %s176 = sand.u32 %s41, 1
        %s177 = scalar_lea.sflag [#allocation3], %s176
        %s178 = sand.u32 %s41, 1
        %s179 = smul.addr %s178, 16
        %s180 = scalar_lea.vmem [#allocation2], %s179
        // Predicated region
        $region29: #{tpu_custom_call.1} parent=27 // pred_check
          %p181 = pneg %p54
        $region30: #{tpu_custom_call.1} parent=27 // pred_check_branch
          %183 = sbr.rel (%p181) target = $region32
        $region31: #{tpu_custom_call.1} parent=27 // pred_region
          %184 = dma.done %s177, 256
        $region32: #{tpu_custom_call.1} parent=27 // pred_fallthru
          _
        %s185 = sand.u32 %s69, 1
        %s186 = scalar_lea.sflag [#allocation5], %s185
        %s187 = sand.u32 %s69, 1
        %s188 = smul.addr %s187, 16
        %s189 = scalar_lea.vmem [#allocation4], %s188
        // Predicated region
        $region33: #{tpu_custom_call.1} parent=27 // pred_check
          %p190 = pneg %p82
        $region34: #{tpu_custom_call.1} parent=27 // pred_check_branch
          %192 = sbr.rel (%p190) target = $region36
        $region35: #{tpu_custom_call.1} parent=27 // pred_region
          %193 = dma.done %s186, 256
        $region36: #{tpu_custom_call.1} parent=27 // pred_fallthru
          _
        %s194 = sand.u32 %s41, 1
        %s195 = scalar_lea.sflag [#allocation3], %s194
        %s196 = sand.u32 %s41, 1
        %s197 = smul.addr %s196, 16
        %s198 = scalar_lea.vmem [#allocation2], %s197
        %p199 = pneg %p54
        %p200 = pneg %p51
        %s201 = sand.u32 %s69, 1
        %s202 = scalar_lea.sflag [#allocation5], %s201
        %s203 = sand.u32 %s69, 1
        %s204 = smul.addr %s203, 16
        %s205 = scalar_lea.vmem [#allocation4], %s204
        %p206 = pneg %p82
        %p207 = pneg %p79
        %p208 = pneg %p108
        %p209 = pneg %p105
        %p210 = scmp.lt.s32.totalorder %s23, 7
        %s211 = scalar_select %p210, %s23, 7
        %s212 = smul.addr %s211, 8
        %s213 = scalar_lea.vmem %s2, %s212
        %s214 = smul.u32 2, %s24
        %s215 = smul.u32 2, %s24
        %p216 = scmp.lt.s32.totalorder %s23, 7
        %s217 = scalar_select %p216, %s23, 7
        %s218 = smul.addr %s217, 8
        %s219 = scalar_lea.vmem %s2, %s218
        %p220 = scmp.eq.s32.totalorder %s24, 0
        // Predicated region
        $region37: #{tpu_custom_call.1} parent=27 // pred_check
          %p221 = pneg %p220
        $region38: #{tpu_custom_call.1} parent=27 // pred_check_branch
          %223 = sbr.rel (%p221) target = $region40
        $region39: #{tpu_custom_call.1} parent=27 // pred_region
          %vm224 = vcmask 31744
          %225 = vst.msk [vmem:[%s219] sm:$0xff] %vm224, 0.0
        $region40: #{tpu_custom_call.1} parent=27 // pred_fallthru
          _
        %v226 = vld [vmem:[%s180] sm:$0xff]
        %v227 = vld [vmem:[%s180 + $0x8] sm:$0xff]
        %v228 = vld [vmem:[%s189] sm:$0xff]
        %v229 = vld [vmem:[%s189 + $0x8] sm:$0xff]
        %v230 = vadd.f32 %v226, 0.0
        %v231 = vadd.f32 %v227, 0.0
        %v232 = vadd.f32 %v230, %v231
        %233 = vadd.xlane.f32.xlu0 %v232
        %v234 = vpop.xlane.xlu0 %233
        %v235 = vmul.f32 %v226, %v226
        %v236 = vmul.f32 %v227, %v227
        %v237 = vadd.f32 %v235, 0.0
        %v238 = vadd.f32 %v236, 0.0
        %v239 = vadd.f32 %v237, %v238
        %240 = vadd.xlane.f32.xlu0 %v239
        %v241 = vpop.xlane.xlu0 %240
        %v242 = vadd.f32 %v228, 0.0
        %v243 = vadd.f32 %v229, 0.0
        %v244 = vadd.f32 %v242, %v243
        %245 = vadd.xlane.f32.xlu0 %v244
        %v246 = vpop.xlane.xlu0 %245
        %v247 = vmul.f32 %v228, %v228
        %v248 = vmul.f32 %v229, %v229
        %v249 = vadd.f32 %v247, 0.0
        %v250 = vadd.f32 %v248, 0.0
        %v251 = vadd.f32 %v249, %v250
        %252 = vadd.xlane.f32.xlu0 %v251
        %v253 = vpop.xlane.xlu0 %252
        %vm254 = vcmask 7168
        %v255 = vsel %vm254, %v234, %v241
        %vm256 = vcmask 15360
        %v257 = vsel %vm256, %v255, %v246
        %vm258 = vcmask 23552
        %v259 = vsel %vm258, %v257, %v253
        %v260 = vld [vmem:[%s219] sm:$0xff]
        %v261 = vadd.f32 %v260, %v259
        %vm262 = vcmask 31744
        %263 = vst.msk [vmem:[%s219] sm:$0xff] %vm262, %v261
        %p264 = scmp.lt.s32.totalorder %s23, 7
        %s265 = scalar_select %p264, %s23, 7
        %s266 = smul.addr %s265, 8
        %s267 = scalar_lea.vmem %s2, %s266
        // Predicated region
        $region41: #{tpu_custom_call.1} parent=27 // pred_check
          %p268 = pneg %p105
        $region42: #{tpu_custom_call.1} parent=27 // pred_check_branch
          %270 = sbr.rel (%p268) target = $region44
        $region43: #{tpu_custom_call.1} parent=27 // pred_region
          _
        $region44: #{tpu_custom_call.1} parent=27 // pred_fallthru
          _
      $region28: #{tpu_custom_call.1} parent=5 // pred_fallthru
        _
      %p271 = scmp.le.s32.totalorder 2, %s14
      // Predicated region
      $region45: #{tpu_custom_call.1} parent=5 // pred_check
        %p272 = pneg %p271
      $region46: #{tpu_custom_call.1} parent=5 // pred_check_branch
        %274 = sbr.rel (%p272) target = $region48
      $region47: #{tpu_custom_call.1} parent=5 // pred_region
        %s275 = ssub.s32 %s14, 2
        // Predicated region
        $region49: #{tpu_custom_call.1} parent=47 // pred_check
          %p276 = pneg %p111
        $region50: #{tpu_custom_call.1} parent=47 // pred_check_branch
          %278 = sbr.rel (%p276) target = $region52
        $region51: #{tpu_custom_call.1} parent=47 // pred_region
          %p279 = scmp.lt.s32.totalorder %s25, 7
          %s280 = scalar_select %p279, %s25, 7
          %s281 = smul.addr %s280, 8
          %s282 = scalar_lea.vmem %s2, %s281
        $region52: #{tpu_custom_call.1} parent=47 // pred_fallthru
          _
      $region48: #{tpu_custom_call.1} parent=5 // pred_fallthru
        _
    $region6: #{tpu_custom_call.1} parent=1 // loop_footer
      %s18 = sadd.s32 1, %s14
    $region7: #{tpu_custom_call.1} parent=1 // loop_footer_branch
      %13 = sbr.rel target = $region3
    $region8: #{tpu_custom_call.1} parent=1 // loop_exit
      _
    %283 = vsyncpa [#allocation3], 1
    %s284 = scalar_lea.sflag [#allocation3], 1
    %285 = vsyncpa %s284, 1
    %286 = vsyncpa [#allocation5], 1
    %s287 = scalar_lea.sflag [#allocation5], 1
    %288 = vsyncpa %s287, 1

</llo_original>
